<compile_context>
chip_gen: v5e
topology: v5e:2x2
jax: 0.10.0
libtpu: 0.0.40
codegen_flags: <defaults>
</compile_context>

<pallas_src>
import jax
import jax.numpy as jnp
from jax.experimental import pallas as pl
from jax.experimental.pallas import tpu as pltpu


# ----------------------------------------------------------------------------
# Tiling helpers
# ----------------------------------------------------------------------------
_TM = _TN = _TK = 512          # matmul tile budget (≈5 MiB VMEM @512, fits v5e)
_ROW_BLK = 1024                # row block for elementwise kernels
_VMEM_LIMIT = 32 * 1024 * 1024  # explicit scoped-VMEM limit (safe on v5e/v6e/v7x)


def _rup(x, m):
    return (x + m - 1) // m * m


def _m_blocking(m):
    """Row (M) blocking: >=2 'parallel' M blocks whenever M > 8 (v7x 2x TC)."""
    gm = 1 if m <= 8 else max(2, -(-m // _TM))
    mp = _rup(m, 8 * gm)
    return mp, mp // gm


def _tile_128(dp, tmax):
    """Largest 128-multiple tile dividing dp (dp is a 128-multiple), <= tmax."""
    q = dp // 128
    for d in range(min(q, tmax // 128), 0, -1):
        if q % d == 0:
            return 128 * d
    return 128


def _row_blocking(n):
    if n <= _ROW_BLK:
        return n, n                       # single full-extent block, no padding
    return _rup(n, _ROW_BLK), _ROW_BLK


def _pad_rows(x, rp):
    n = x.shape[0]
    if n == rp:
        return x
    return jnp.pad(x, ((0, rp - n),) + ((0, 0),) * (x.ndim - 1))


def pack_weight(w):
    """Pre-pad a [K, N] f32 weight to TPU tile alignment once, stored bf16."""
    K, N = w.shape
    Kp = _rup(K, 128) if K <= _TK else _rup(K, _TK)
    Np = _rup(N, 128) if N <= _TN else _rup(N, _TN)
    wp = jnp.zeros((Kp, Np), jnp.bfloat16).at[:K, :N].set(w.astype(jnp.bfloat16))
    return {'w': wp, 'k': K, 'n': N}


# ----------------------------------------------------------------------------
# Pallas kernels
# ----------------------------------------------------------------------------
def _mm_kernel(a_ref, b_ref, o_ref):
    # Single K block: no accumulator needed; cast to bf16 in-kernel (VPU).
    o_ref[...] = jnp.dot(a_ref[...].astype(jnp.bfloat16), b_ref[...],
                         preferred_element_type=jnp.float32)


def _mm_kernel_acc(a_ref, b_ref, o_ref):
    # f32 output block resident across the K axis -> accumulate in place.
    @pl.when(pl.program_id(2) == 0)
    def _():
        o_ref[...] = jnp.zeros_like(o_ref)

    o_ref[...] += jnp.dot(a_ref[...].astype(jnp.bfloat16), b_ref[...],
                          preferred_element_type=jnp.float32)


def pallas_matmul(a, wpack):
    """f32 activation [M, K] @ pre-padded bf16 weight -> f32 [M, n_out].

    The f32->bf16 cast runs inside the kernel (hidden under the MXU push), so
    no bf16 copy of the activation round-trips HBM.
    """
    M, K = a.shape
    wp, n_out = wpack['w'], wpack['n']
    assert K == wpack['k'], (K, wpack['k'])
    Kp, Np = wp.shape
    Mp, tm = _m_blocking(M)
    tn = _tile_128(Np, _TN)
    tk = _tile_128(Kp, _TK)
    a_p = a if (M, K) == (Mp, Kp) else jnp.pad(a, ((0, Mp - M), (0, Kp - K)))

    gm, gn, gk = Mp // tm, Np // tn, Kp // tk
    cost = pl.CostEstimate(
        flops=2 * Mp * Kp * Np, transcendentals=0,
        bytes_accessed=Mp * Kp * 4 + Kp * Np * 2 + Mp * Np * 4)

    if gk == 1:
        out = pl.pallas_call(
            _mm_kernel,
            out_shape=jax.ShapeDtypeStruct((Mp, Np), jnp.float32),
            grid=(gm, gn),
            in_specs=[pl.BlockSpec((tm, Kp), lambda i, j: (i, 0)),
                      pl.BlockSpec((Kp, tn), lambda i, j: (0, j))],
            out_specs=pl.BlockSpec((tm, tn), lambda i, j: (i, j)),
            compiler_params=pltpu.CompilerParams(
                dimension_semantics=("parallel", "parallel"),
                vmem_limit_bytes=_VMEM_LIMIT),
            cost_estimate=cost,
        )(a_p, wp)
    else:
        out = pl.pallas_call(
            _mm_kernel_acc,
            out_shape=jax.ShapeDtypeStruct((Mp, Np), jnp.float32),
            grid=(gm, gn, gk),
            in_specs=[pl.BlockSpec((tm, tk), lambda i, j, k: (i, k)),
                      pl.BlockSpec((tk, tn), lambda i, j, k: (k, j))],
            out_specs=pl.BlockSpec((tm, tn), lambda i, j, k: (i, j)),
            compiler_params=pltpu.CompilerParams(
                dimension_semantics=("parallel", "parallel", "arbitrary"),
                vmem_limit_bytes=_VMEM_LIMIT),
            cost_estimate=cost,
        )(a_p, wp)
    return out[:M, :n_out]


def _concat_norm_elu_kernel(l_ref, r_ref, m_ref, s_ref, g_ref, b_ref, o_ref):
    # Fused: concat(left, right) -> (x - mean) * inv * gamma + beta -> ELU.
    # (The concat is kept in-kernel: writing the two halves to lane-offset
    #  slices of o_ref would need non-128-aligned lane stores; at C<=200 the
    #  concat is a couple of cheap XLU ops and the data never touches HBM.)
    y = jnp.concatenate([l_ref[...], r_ref[...]], axis=-1)
    y = (y - m_ref[...]) * s_ref[...] * g_ref[...] + b_ref[...]
    o_ref[...] = jnp.where(y > 0, y, jnp.exp(y) - 1.0)


def pallas_concat_norm_elu(left, right, mean_rows, inv_rows, gamma, beta):
    N, C1 = left.shape
    C2 = right.shape[1]
    C = C1 + C2
    Rp, rb = _row_blocking(N)
    l_p, r_p = _pad_rows(left, Rp), _pad_rows(right, Rp)
    m_p = _pad_rows(mean_rows[:, None], Rp)
    s_p = _pad_rows(inv_rows[:, None], Rp)
    cost = pl.CostEstimate(flops=8 * Rp * C, transcendentals=Rp * C,
                           bytes_accessed=4 * (2 * Rp * C + 2 * Rp + 2 * C + Rp * C))
    out = pl.pallas_call(
        _concat_norm_elu_kernel,
        out_shape=jax.ShapeDtypeStruct((Rp, C), jnp.float32),
        grid=(Rp // rb,),
        in_specs=[pl.BlockSpec((rb, C1), lambda i: (i, 0)),
                  pl.BlockSpec((rb, C2), lambda i: (i, 0)),
                  pl.BlockSpec((rb, 1), lambda i: (i, 0)),
                  pl.BlockSpec((rb, 1), lambda i: (i, 0)),
                  pl.BlockSpec((1, C), lambda i: (0, 0)),
                  pl.BlockSpec((1, C), lambda i: (0, 0))],
        out_specs=pl.BlockSpec((rb, C), lambda i: (i, 0)),
        compiler_params=pltpu.CompilerParams(dimension_semantics=("parallel",)),
        cost_estimate=cost,
    )(l_p, r_p, m_p, s_p, gamma[None, :], beta[None, :])
    return out[:N]


def _residual_elu_kernel(res_ref, x_ref, o_ref):
    x = x_ref[...]
    o_ref[...] = res_ref[...] + jnp.where(x > 0, x, jnp.exp(x) - 1.0)


def pallas_residual_elu(res, x):
    """out = res + ELU(x)  (dropout p=0.1 is identity in eval mode)."""
    N, C = x.shape
    Rp, rb = _row_blocking(N)
    r_p, x_p = _pad_rows(res, Rp), _pad_rows(x, Rp)
    cost = pl.CostEstimate(flops=4 * Rp * C, transcendentals=Rp * C,
                           bytes_accessed=4 * 3 * Rp * C)
    out = pl.pallas_call(
        _residual_elu_kernel,
        out_shape=jax.ShapeDtypeStruct((Rp, C), jnp.float32),
        grid=(Rp // rb,),
        in_specs=[pl.BlockSpec((rb, C), lambda i: (i, 0)),
                  pl.BlockSpec((rb, C), lambda i: (i, 0))],
        out_specs=pl.BlockSpec((rb, C), lambda i: (i, 0)),
        compiler_params=pltpu.CompilerParams(dimension_semantics=("parallel",)),
        cost_estimate=cost,
    )(r_p, x_p)
    return out[:N]


# ----------------------------------------------------------------------------
# Graph glue (irregular gather / scatter kept in plain JAX segment ops)
# ----------------------------------------------------------------------------
def _seg_sum(x, seg, n):
    return jax.ops.segment_sum(x, seg, num_segments=n)


def _seg_max(x, seg, n):
    return jax.ops.segment_max(x, seg, num_segments=n)


def gat_aggregate(h_src, a_src, a_dst, src, dst, n_dst, bias, a_edge=None,
                  add_self_loops=True, n_loop=None):
    """PyG-style GATConv attention + aggregation from precomputed projections.

    h_src: [Ns, H, C]  a_src: [Ns, H]  a_dst: [Nd, H]  a_edge: [E, H] or None.
    LeakyReLU(0.2) -> segment softmax over dst -> weighted scatter-add,
    concat-heads output + bias.  Self-loop handling follows PyG: existing self
    loops are removed, loop edges (i, i) re-added for i < n_loop
    (min(Ns, Nd) for bipartite convs), edge-attr fill_value='mean' per dst.
    """
    H, C = h_src.shape[1], h_src.shape[2]
    alpha = a_src[src] + a_dst[dst]
    if a_edge is not None:
        alpha = alpha + a_edge
    e_src, e_dst = src, dst
    keep_full = None
    if add_self_loops:
        n_loop = n_dst if n_loop is None else n_loop
        keep = src != dst                      # PyG removes existing self loops
        alpha = jnp.where(keep[:, None], alpha, -1e30)
        loops = jnp.arange(n_loop, dtype=src.dtype)
        loop_alpha = a_src[:n_loop] + a_dst[:n_loop]
        if a_edge is not None:
            keepf = keep.astype(jnp.float32)
            cnt = jnp.maximum(_seg_sum(keepf, dst, n_dst), 1.0)
            mean_e = _seg_sum(a_edge * keepf[:, None], dst, n_dst) / cnt[:, None]
            loop_alpha = loop_alpha + mean_e[:n_loop]
        e_src = jnp.concatenate([src, loops])
        e_dst = jnp.concatenate([dst, loops])
        alpha = jnp.concatenate([alpha, loop_alpha], axis=0)
        keep_full = jnp.concatenate([keep, jnp.ones((n_loop,), dtype=bool)])

    alpha = jnp.where(alpha > 0, alpha, 0.2 * alpha)        # LeakyReLU(0.2)

    # segment softmax over destination (attention dropout: identity in eval)
    m = _seg_max(alpha, e_dst, n_dst)
    m = jnp.where(m > -1e29, m, 0.0)                        # isolated-dst guard
    ex = jnp.exp(alpha - m[e_dst])
    s = _seg_sum(ex, e_dst, n_dst)
    attn = ex / (s[e_dst] + 1e-16)
    if keep_full is not None:
        attn = attn * keep_full[:, None].astype(attn.dtype)

    # TODO(synk): fuse gather / segment-softmax / weighted scatter into one
    # PrefetchScalarGridSpec Pallas kernel (dst-sorted edge index prefetch) so
    # the [E, H, C] message tensor never round-trips HBM.
    msg = h_src[e_src] * attn[:, :, None]
    out = _seg_sum(msg, e_dst, n_dst)
    return out.reshape(n_dst, H * C) + bias


def graph_norm_elu(left, right, batch, num_graphs, gamma, beta, eps=1e-5):
    """PyG LayerNorm (mode='graph') over concat([left, right], -1) + ELU.

    Per-graph mean / variance computed in a single pass (E[x^2] - mean^2);
    concat + normalize + affine + ELU fused in one Pallas kernel."""
    N = left.shape[0]
    C = left.shape[1] + right.shape[1]
    cnt = jnp.maximum(_seg_sum(jnp.ones((N,), jnp.float32), batch, num_graphs),
                      1.0) * C
    row_sum = jnp.sum(left, -1) + jnp.sum(right, -1)
    row_sq = jnp.sum(left * left, -1) + jnp.sum(right * right, -1)
    mean_g = _seg_sum(row_sum, batch, num_graphs) / cnt
    var_g = jnp.maximum(_seg_sum(row_sq, batch, num_graphs) / cnt - mean_g ** 2,
                        0.0)
    inv_g = jax.lax.rsqrt(var_g + eps)
    return pallas_concat_norm_elu(left, right, mean_g[batch], inv_g[batch],
                                  gamma, beta)


def sag_pool(p, x, edge_index, batch, num_graphs):
    """SAGPooling(min_score=-1): GraphConv score -> per-graph softmax; the
    softmax score is always > -1 so every node survives in original order."""
    src, dst = edge_index[0], edge_index[1]
    agg = _seg_sum(x[src], dst, x.shape[0])
    feat = jnp.concatenate([agg, x], axis=-1)   # GraphConv: W_rel.agg + W_root.x
    score = pallas_matmul(feat, p['score_pack'])[:, 0] + p['score_bias']
    m = _seg_max(score, batch, num_graphs)
    e = jnp.exp(score - m[batch])
    s = _seg_sum(e, batch, num_graphs)
    sm = e / (s[batch] + 1e-16)
    return x * sm[:, None], batch


def global_add_pool(x, batch, num_graphs):
    return _seg_sum(x, batch, num_graphs)


# ----------------------------------------------------------------------------
# MIFBlock forward
# ----------------------------------------------------------------------------
def mif_block_forward(params, atom_x, atom_edge_index, bond_x, atom_batch,
                      aa_x, aa_edge_index, aa_edge_attr, aa_batch,
                      m2p_edge_index, num_graphs):
    H, Cd, Cp = params['heads'], params['hid'], params['pool_hid']
    HC, HCp = H * Cd, H * Cp
    n_atom, n_aa = atom_x.shape[0], aa_x.shape[0]
    m2p_atom, m2p_aa = m2p_edge_index[0], m2p_edge_index[1]
    n_loop_bi = min(n_atom, n_aa)

    # ---- fused input projections: one MXU launch per activation -------------
    pa = pallas_matmul(atom_x, params['atom_x_pack'])        # [n_atom, HC+3H]
    pb = pallas_matmul(aa_x, params['aa_x_pack'])            # [n_aa, 2HC+4H]
    pe_bond = pallas_matmul(bond_x, params['bond_pack'])     # [E_atom, 2H]
    pe_aa = pallas_matmul(aa_edge_attr, params['aa_edge_pack'])  # [E_aa, H]

    d_h = pa[:, :HC].reshape(n_atom, H, Cd)
    d_as = pa[:, HC:HC + H]
    d_ad = pa[:, HC + H:HC + 2 * H]
    i_ad_atom = pa[:, HC + 2 * H:HC + 3 * H]                 # inter A_dst(atom)

    p_h = pb[:, :HC].reshape(n_aa, H, Cd)
    p_as = pb[:, HC:HC + H]
    p_ad = pb[:, HC + H:HC + 2 * H]
    o = HC + 2 * H
    i_h_aa = pb[:, o:o + HC].reshape(n_aa, H, Cd)            # inter W_src(aa)
    i_as_aa = pb[:, o + HC:o + HC + H]
    i_ad_aa = pb[:, o + HC + H:o + HC + 2 * H]               # inter A_dst(aa)

    # ---- drug branch ---------------------------------------------------------
    atom_intra = gat_aggregate(d_h, d_as, d_ad,
                               atom_edge_index[0], atom_edge_index[1],
                               n_atom, params['drug_conv_bias'],
                               a_edge=pe_bond[:, :H])
    atom_inter = gat_aggregate(i_h_aa, i_as_aa, i_ad_atom,
                               m2p_aa, m2p_atom, n_atom,
                               params['inter_conv_bias'], n_loop=n_loop_bi)
    atom_x_n = graph_norm_elu(atom_intra, atom_inter, atom_batch, num_graphs,
                              params['drug_norm']['gamma'],
                              params['drug_norm']['beta'])

    # ---- protein branch ------------------------------------------------------
    aa_intra = gat_aggregate(p_h, p_as, p_ad,
                             aa_edge_index[0], aa_edge_index[1],
                             n_aa, params['prot_conv_bias'], a_edge=pe_aa)

    pn = pallas_matmul(atom_x_n, params['atom_n_pack'])      # [n_atom, HCp+2H+HC+H]
    pool_h = pn[:, :HCp].reshape(n_atom, H, Cp)
    pool_as = pn[:, HCp:HCp + H]
    pool_ad = pn[:, HCp + H:HCp + 2 * H]
    o2 = HCp + 2 * H
    i_h_atom = pn[:, o2:o2 + HC].reshape(n_atom, H, Cd)      # inter W_src(atom_n)
    i_as_atom = pn[:, o2 + HC:o2 + HC + H]

    aa_inter = gat_aggregate(i_h_atom, i_as_atom, i_ad_aa,
                             m2p_atom, m2p_aa, n_aa,
                             params['inter_conv_bias'], n_loop=n_loop_bi)
    aa_x_n = graph_norm_elu(aa_intra, aa_inter, aa_batch, num_graphs,
                            params['prot_norm']['gamma'],
                            params['prot_norm']['beta'])

    # ---- pooling + residual --------------------------------------------------
    atom_pooled = gat_aggregate(pool_h, pool_as, pool_ad,
                                atom_edge_index[0], atom_edge_index[1],
                                n_atom, params['drug_pool_bias'],
                                a_edge=pe_bond[:, H:2 * H])
    aa_pooled, aa_batch_new = sag_pool(params['prot_pool'], aa_x_n,
                                       aa_edge_index, aa_batch, num_graphs)

    # F.dropout(p=0.1, training=False) == identity
    atom_out = pallas_residual_elu(atom_x, atom_pooled)
    aa_out = pallas_residual_elu(aa_x, aa_pooled)

    drug_global = global_add_pool(atom_out, atom_batch, num_graphs)
    prot_global = global_add_pool(aa_out, aa_batch_new, num_graphs)
    return atom_out, aa_out, drug_global, prot_global


# ----------------------------------------------------------------------------
# Deterministic parameter construction (weights pre-fused & pre-padded at init)
# ----------------------------------------------------------------------------
def _init(key, shape, scale=0.1):
    return scale * jax.random.normal(key, shape, dtype=jnp.float32)


def _att_cols(W, att):
    """[K, H*C], [H, C] -> [K, H]: (x @ W) per-head-dotted with att == x @ cols."""
    K = W.shape[0]
    H, C = att.shape
    return jnp.einsum('khc,hc->kh', W.reshape(K, H, C), att)


def init_params(key, in_ch, out_ch, heads, bond_dim, aa_edge_dim):
    assert in_ch == out_ch, "MIFBlock re-feeds its outputs into inter_conv"
    H = heads
    hid = out_ch // (H * 2)
    pool_hid = out_ch // H
    ks = jax.random.split(key, 22)

    # drug_conv (shared lin, edge attention)
    W_drug = _init(ks[0], (in_ch, H * hid))
    as_drug, ad_drug = _init(ks[1], (H, hid)), _init(ks[2], (H, hid))
    We_drug, ae_drug = _init(ks[3], (bond_dim, H * hid)), _init(ks[4], (H, hid))
    # prot_conv
    W_prot = _init(ks[5], (in_ch, H * hid))
    as_prot, ad_prot = _init(ks[6], (H, hid)), _init(ks[7], (H, hid))
    We_prot, ae_prot = _init(ks[8], (aa_edge_dim, H * hid)), _init(ks[9], (H, hid))
    # inter_conv (bipartite: separate src/dst lins)
    Ws_int, as_int = _init(ks[10], (in_ch, H * hid)), _init(ks[11], (H, hid))
    Wd_int, ad_int = _init(ks[12], (in_ch, H * hid)), _init(ks[13], (H, hid))
    # drug_pool GATConv
    W_pool = _init(ks[14], (out_ch, H * pool_hid))
    as_pool, ad_pool = _init(ks[15], (H, pool_hid)), _init(ks[16], (H, pool_hid))
    We_pool, ae_pool = _init(ks[17], (bond_dim, H * pool_hid)), _init(ks[18], (H, pool_hid))
    # prot_pool (SAGPooling GraphConv score)
    W_rel, W_root = _init(ks[19], (out_ch, 1)), _init(ks[20], (out_ch, 1))

    return {
        'heads': H, 'hid': hid, 'pool_hid': pool_hid,
        # fused weight packs (one matmul launch per consuming activation)
        'atom_x_pack': pack_weight(jnp.concatenate(
            [W_drug, _att_cols(W_drug, as_drug), _att_cols(W_drug, ad_drug),
             _att_cols(Wd_int, ad_int)], axis=1)),
        'aa_x_pack': pack_weight(jnp.concatenate(
            [W_prot, _att_cols(W_prot, as_prot), _att_cols(W_prot, ad_prot),
             Ws_int, _att_cols(Ws_int, as_int), _att_cols(Wd_int, ad_int)], axis=1)),
        'atom_n_pack': pack_weight(jnp.concatenate(
            [W_pool, _att_cols(W_pool, as_pool), _att_cols(W_pool, ad_pool),
             Ws_int, _att_cols(Ws_int, as_int)], axis=1)),
        'bond_pack': pack_weight(jnp.concatenate(
            [_att_cols(We_drug, ae_drug), _att_cols(We_pool, ae_pool)], axis=1)),
        'aa_edge_pack': pack_weight(_att_cols(We_prot, ae_prot)),
        # biases (PyG GATConv bias init = zeros)
        'drug_conv_bias': jnp.zeros((H * hid,), jnp.float32),
        'prot_conv_bias': jnp.zeros((H * hid,), jnp.float32),
        'inter_conv_bias': jnp.zeros((H * hid,), jnp.float32),
        'drug_pool_bias': jnp.zeros((H * pool_hid,), jnp.float32),
        'drug_norm': {'gamma': jnp.ones((out_ch,), jnp.float32),
                      'beta': jnp.zeros((out_ch,), jnp.float32)},
        'prot_norm': {'gamma': jnp.ones((out_ch,), jnp.float32),
                      'beta': jnp.zeros((out_ch,), jnp.float32)},
        'prot_pool': {'score_pack': pack_weight(jnp.concatenate([W_rel, W_root],
                                                                axis=0)),
                      'score_bias': jnp.zeros((), jnp.float32)},
    }


def _rand_edges(key, lo_s, hi_s, lo_d, hi_d, n):
    k1, k2 = jax.random.split(key)
    src = jax.random.randint(k1, (n,), lo_s, hi_s, dtype=jnp.int32)
    dst = jax.random.randint(k2, (n,), lo_d, hi_d, dtype=jnp.int32)
    return jnp.stack([src, dst])


# ----------------------------------------------------------------------------
if __name__ == "__main__":
    IN_CH, OUT_CH, HEADS = 40, 40, 5          # hidden = 40 // (5*2) = 4
    N_ATOM, N_AA, G = 16, 12, 2
    E_ATOM, E_AA, E_M2P = 40, 30, 24
    BOND_DIM, AA_EDGE_DIM = 6, 6

    root = jax.random.PRNGKey(0)
    ks = jax.random.split(root, 16)

    atom_x = _init(ks[0], (N_ATOM, IN_CH), scale=1.0)
    aa_x = _init(ks[1], (N_AA, IN_CH), scale=1.0)
    bond_x = _init(ks[2], (E_ATOM, BOND_DIM), scale=1.0)
    aa_edge_attr = _init(ks[3], (E_AA, AA_EDGE_DIM), scale=1.0)

    atom_batch = jnp.concatenate([jnp.zeros(8, jnp.int32), jnp.ones(8, jnp.int32)])
    aa_batch = jnp.concatenate([jnp.zeros(6, jnp.int32), jnp.ones(6, jnp.int32)])

    atom_edge_index = jnp.concatenate(
        [_rand_edges(ks[4], 0, 8, 0, 8, E_ATOM // 2),
         _rand_edges(ks[5], 8, 16, 8, 16, E_ATOM // 2)], axis=1)
    aa_edge_index = jnp.concatenate(
        [_rand_edges(ks[6], 0, 6, 0, 6, E_AA // 2),
         _rand_edges(ks[7], 6, 12, 6, 12, E_AA // 2)], axis=1)
    # m2p: row 0 = atom (drug) node, row 1 = amino-acid node
    m2p_edge_index = jnp.concatenate(
        [_rand_edges(ks[8], 0, 8, 0, 6, E_M2P // 2),
         _rand_edges(ks[9], 8, 16, 6, 12, E_M2P // 2)], axis=1)

    params = init_params(ks[10], IN_CH, OUT_CH, HEADS, BOND_DIM, AA_EDGE_DIM)

    outs = mif_block_forward(params, atom_x, atom_edge_index, bond_x, atom_batch,
                             aa_x, aa_edge_index, aa_edge_attr, aa_batch,
                             m2p_edge_index, G)
    outs = jax.block_until_ready(outs)
    atom_out, aa_out, drug_g, prot_g = outs
    assert atom_out.shape == (N_ATOM, OUT_CH)
    assert aa_out.shape == (N_AA, OUT_CH)
    assert drug_g.shape == (G, OUT_CH)
    assert prot_g.shape == (G, OUT_CH)
    assert bool(jnp.all(jnp.isfinite(atom_out))) and bool(jnp.all(jnp.isfinite(aa_out)))
    assert bool(jnp.all(jnp.isfinite(drug_g))) and bool(jnp.all(jnp.isfinite(prot_g)))
    print("KERNEL_OK")
</pallas_src>

<mosaic_0001>
module attributes {stable_mosaic.version = 11 : i64} {
  func.func @_mm_kernel(%arg0: i32, %arg1: i32, %arg2: memref<8x128xf32, #tpu.memory_space<vmem>>, %arg3: memref<128x128xbf16, #tpu.memory_space<vmem>>, %arg4: memref<8x128xf32, #tpu.memory_space<vmem>>) attributes {dimension_semantics = [#tpu.dimension_semantics<parallel>, #tpu.dimension_semantics<parallel>], iteration_bounds = array<i64: 2, 1>, scalar_prefetch = 0 : i64, scratch_operands = 0 : i64, tpu.core_type = #tpu.core_type<tc>, window_params = [{transform_indices = @transform_0, window_bounds = array<i64: 8, 128>}, {transform_indices = @transform_1, window_bounds = array<i64: 128, 128>}, {transform_indices = @transform_2, window_bounds = array<i64: 8, 128>}]} {
    %c0 = arith.constant 0 : index
    %c0_0 = arith.constant 0 : index
    %0 = vector.load %arg2[%c0, %c0_0] : memref<8x128xf32, #tpu.memory_space<vmem>>, vector<8x128xf32>
    %1 = arith.truncf %0 : vector<8x128xf32> to vector<8x128xbf16>
    %c0_1 = arith.constant 0 : index
    %c0_2 = arith.constant 0 : index
    %2 = vector.load %arg3[%c0_1, %c0_2] : memref<128x128xbf16, #tpu.memory_space<vmem>>, vector<128x128xbf16>
    %cst = arith.constant dense<0.000000e+00> : vector<8x128xf32>
    %3 = tpu.matmul %1, %2, %cst {dimension_numbers = #tpu.dot_dimension_numbers<[1], [0], [0], [1], [0, 0, 1, 1], [], []>} : vector<8x128xbf16>, vector<128x128xbf16>, vector<8x128xf32> -> vector<8x128xf32>
    %c0_3 = arith.constant 0 : index
    %c0_4 = arith.constant 0 : index
    %4 = vector.load %arg4[%c0_3, %c0_4] : memref<8x128xf32, #tpu.memory_space<vmem>>, vector<8x128xf32>
    tpu.vector_store %arg4[%c0_3, %c0_4], %3 {strides = array<i32>} : memref<8x128xf32, #tpu.memory_space<vmem>>, vector<8x128xf32>,
    return
  }
  func.func @transform_0(%arg0: i32, %arg1: i32) -> (i32, i32) {
    %c0_i32 = arith.constant 0 : i32
    %c0_i32_0 = arith.constant 0 : i32
    return %arg0, %c0_i32 : i32, i32
  }
  func.func @transform_1(%arg0: i32, %arg1: i32) -> (i32, i32) {
    %c0_i32 = arith.constant 0 : i32
    %c0_i32_0 = arith.constant 0 : i32
    return %c0_i32, %arg1 : i32, i32
  }
  func.func @transform_2(%arg0: i32, %arg1: i32) -> (i32, i32) {
    %c0_i32 = arith.constant 0 : i32
    return %arg0, %arg1 : i32, i32
  }
}

</mosaic_0001>

<llo_original>
// kernel: tpu_custom_call.1
$region0: #{tpu_custom_call.1}
  #allocation0 [shape = 'u32[]', space=smem, size = 0x4, offset = 0x4, fixed_abs, tag = 'smem constant byte address 0x4 - core index']
  #allocation1 [shape = 'u32[72,128]{1,0:T(1,128)}', space=vmem, size = 0x9000, scoped, tag = 'internal scratch']
  %s0 = inlined_call_operand.hbm [shape: f32[16,128], index: 0, kind: input, shape index: {}]
  %s1 = inlined_call_operand.hbm [shape: bf16[128,128], index: 1, kind: input, shape index: {}]
  %s2 = inlined_call_operand.hbm [shape: f32[16,128], index: 2, kind: output, shape index: {}]
  %s3 = sld [smem:[#allocation0]]
  $region49: #{tpu_custom_call.1} parent=0
    _
  %s5 = ssub.s32 1, %s3
  %s6 = scalar_select 0, %s5, %s3
  $region1: #{tpu_custom_call.1} parent=0
    #allocation2 [shape = 'u8[8192]{0}', space=vmem, size = 0x2000, scoped, tag = 'input window, operand 0']
    #allocation3 [shape = 's32[2]{0}', space=sflag, size = 0x8, scoped, tag = 'scoped memory for tpu_custom_call.1']
    #allocation4 [shape = 's32[2]{0}', space=sflag, size = 0x8, scoped, tag = 'scoped memory for tpu_custom_call.1']
    #allocation5 [shape = 'u8[32768]{0}', space=vmem, size = 0x8000, scoped, tag = 'input window, operand 1, single buffered']
    #allocation6 [shape = 's32[1]{0}', space=sflag, size = 0x4, scoped, tag = 'scoped memory for tpu_custom_call.1']
    #allocation7 [shape = 'u8[8192]{0}', space=vmem, size = 0x2000, scoped, tag = 'output window, operand 0']
    %7 = vsyncpa [#allocation3], 0
    %s8 = scalar_lea.sflag [#allocation3], 1
    %9 = vsyncpa %s8, 0
    %10 = vsyncpa [#allocation6], 0
    %11 = vsyncpa [#allocation4], 0
    %s12 = scalar_lea.sflag [#allocation4], 1
    %13 = vsyncpa %s12, 0
    loop: start=0, step=1, limit=4
    $region2: #{tpu_custom_call.1} parent=1 // loop_pre_header
      _
    $region3: #{tpu_custom_call.1} parent=1 // loop_header
      %s15 = sphi 0, %s19
      %p16 = scmp.ge.s32.totalorder %s15, 4
      %s22 = sphi 0, %s34
      %s23 = sphi 0, %s30
      %s24 = sphi 0, %s22
      %s25 = sphi 0, %s23
      %s26 = sphi 0, %s24
      %s27 = sphi 0, %s25
      %s37 = sphi 0, %s39
      %s40 = sphi 0, %s37
      %s41 = sphi 0, %s40
      %s57 = sphi 0, %s41
      %s63 = sphi 0, %s65
      %s66 = sphi 0, %s63
      %s67 = sphi 0, %s66
      %s83 = sphi 0, %s67
      %s91 = sphi 0, %s93
      %s94 = sphi 0, %s91
      %s95 = sphi 0, %s94
      %s111 = sphi 0, %s95
    $region4: #{tpu_custom_call.1} parent=1 // loop_header_branch
      %18 = sbr.rel (%p16) target = $region8
    $region5: #{tpu_custom_call.1} parent=1 // loop_body
      %s20 = ssub.s32 %s15, 1
      %s21 = ssub.s32 %s15, 2
      %s28 = sadd.s32 1, %s23
      %p29 = scmp.ge.s32.totalorder %s28, 1
      %s30 = scalar_select %p29, 0, %s28
      %s31 = sadd.s32 1, %s22
      %s32 = scalar_select %p29, %s31, %s22
      %p33 = scmp.ge.s32.totalorder %s32, 2
      %s34 = scalar_select %p33, 0, %s32
      %s35 = ssub.s32 %s22, %s34
      %p36 = scmp.eq.s32.totalorder %s35, 0
      %s38 = sadd.s32 %s37, 1
      %s39 = scalar_select %p36, %s37, %s38
      %p42 = pneg %p36
      %p43 = scmp.eq.s32.totalorder %s15, 1
      %p44 = por %p42, %p43
      %p45 = scmp.ne.s32.totalorder %s37, %s40
      %p46 = scmp.eq.s32.totalorder %s15, 0
      %p47 = por %p45, %p46
      %p48 = scmp.ne.s32.totalorder %s37, %s40
      %p49 = scmp.eq.s32.totalorder %s20, 1
      %p50 = por %p48, %p49
      %p51 = scmp.ne.s32.totalorder %s40, %s41
      %p52 = scmp.eq.s32.totalorder %s20, 0
      %p53 = por %p51, %p52
      %p54 = scmp.ne.s32.totalorder %s40, %s41
      %p55 = scmp.eq.s32.totalorder %s21, 1
      %p56 = por %p54, %p55
      %p58 = scmp.ne.s32.totalorder %s41, %s57
      %p59 = scmp.eq.s32.totalorder %s21, 0
      %p60 = por %p58, %p59
      %s61 = ssub.s32 %s23, %s30
      %p62 = scmp.eq.s32.totalorder %s61, 0
      %s64 = sadd.s32 %s63, 1
      %s65 = scalar_select %p62, %s63, %s64
      %p68 = pneg %p62
      %p69 = scmp.eq.s32.totalorder %s15, 1
      %p70 = por %p68, %p69
      %p71 = scmp.ne.s32.totalorder %s63, %s66
      %p72 = scmp.eq.s32.totalorder %s15, 0
      %p73 = por %p71, %p72
      %p74 = scmp.ne.s32.totalorder %s63, %s66
      %p75 = scmp.eq.s32.totalorder %s20, 1
      %p76 = por %p74, %p75
      %p77 = scmp.ne.s32.totalorder %s66, %s67
      %p78 = scmp.eq.s32.totalorder %s20, 0
      %p79 = por %p77, %p78
      %p80 = scmp.ne.s32.totalorder %s66, %s67
      %p81 = scmp.eq.s32.totalorder %s21, 1
      %p82 = por %p80, %p81
      %p84 = scmp.ne.s32.totalorder %s67, %s83
      %p85 = scmp.eq.s32.totalorder %s21, 0
      %p86 = por %p84, %p85
      %s87 = ssub.s32 %s22, %s34
      %s88 = ssub.s32 %s23, %s30
      %s89 = sor.u32 %s87, %s88
      %p90 = scmp.eq.s32.totalorder %s89, 0
      %s92 = sadd.s32 %s91, 1
      %s93 = scalar_select %p90, %s91, %s92
      %p96 = pneg %p90
      %p97 = scmp.eq.s32.totalorder %s15, 1
      %p98 = por %p96, %p97
      %p99 = scmp.ne.s32.totalorder %s91, %s94
      %p100 = scmp.eq.s32.totalorder %s15, 0
      %p101 = por %p99, %p100
      %p102 = scmp.ne.s32.totalorder %s91, %s94
      %p103 = scmp.eq.s32.totalorder %s20, 1
      %p104 = por %p102, %p103
      %p105 = scmp.ne.s32.totalorder %s94, %s95
      %p106 = scmp.eq.s32.totalorder %s20, 0
      %p107 = por %p105, %p106
      %p108 = scmp.ne.s32.totalorder %s94, %s95
      %p109 = scmp.eq.s32.totalorder %s21, 1
      %p110 = por %p108, %p109
      %p112 = scmp.ne.s32.totalorder %s95, %s111
      %p113 = scmp.eq.s32.totalorder %s21, 0
      %p114 = por %p112, %p113
      %p115 = scmp.le.s32.totalorder 1, %s15
      %p116 = scmp.lt.s32.totalorder %s15, 3
      %p117 = pnand %p115, %p116
      %p118 = pneg %p117
      // Predicated region
      $region9: #{tpu_custom_call.1} parent=5 // pred_check
        _
      $region10: #{tpu_custom_call.1} parent=5 // pred_check_branch
        %120 = sbr.rel (%p117) target = $region12
      $region11: #{tpu_custom_call.1} parent=5 // pred_region
        %s121 = ssub.s32 %s15, 1
        // Predicated region
        $region13: #{tpu_custom_call.1} parent=11 // pred_check
          %p122 = pneg %p79
        $region14: #{tpu_custom_call.1} parent=11 // pred_check_branch
          %124 = sbr.rel (%p122) target = $region16
        $region15: #{tpu_custom_call.1} parent=11 // pred_region
          %126 = vsyncadd [#allocation6], 0
          %s127 = smul.addr %s25, 4
          %s128 = scalar_lea.hbm %s1, %s127
          %s129 = sshll.u32 %s128, 4
          %s130 = int_to_ptr.hbm [resolvable:$true] %s129
          %s131 = sshll.u32 [#allocation5], 4
          %s132 = int_to_ptr.vmem [resolvable:$true] %s131
          %137 = dma.hbm_to_vmem [thread:$0]  %s130, 1024, %s132, [#allocation6], 64, 64, 4
        $region16: #{tpu_custom_call.1} parent=11 // pred_fallthru
          _
      $region12: #{tpu_custom_call.1} parent=5 // pred_fallthru
        _
      %p138 = scmp.lt.s32.totalorder %s15, 2
      // Predicated region
      $region17: #{tpu_custom_call.1} parent=5 // pred_check
        %p139 = pneg %p138
      $region18: #{tpu_custom_call.1} parent=5 // pred_check_branch
        %141 = sbr.rel (%p139) target = $region20
      $region19: #{tpu_custom_call.1} parent=5 // pred_region
        // Predicated region
        $region21: #{tpu_custom_call.1} parent=19 // pred_check
          %p142 = pneg %p47
        $region22: #{tpu_custom_call.1} parent=19 // pred_check_branch
          %144 = sbr.rel (%p142) target = $region24
        $region23: #{tpu_custom_call.1} parent=19 // pred_region
          %s145 = sand.u32 %s37, 1
          %s146 = scalar_lea.sflag [#allocation3], %s145
          %s147 = sand.u32 %s37, 1
          %s148 = smul.addr %s147, 8
          %s149 = scalar_lea.vmem [#allocation2], %s148
          %151 = vsyncadd %s146, 0
          %s152 = smul.addr %s22, 8
          %s153 = scalar_lea.hbm %s0, %s152
          %s155 = sshll.u32 %s153, 4
          %s156 = int_to_ptr.hbm [resolvable:$true] %s155
          %s157 = sshll.u32 %s149, 4
          %s158 = int_to_ptr.vmem [resolvable:$true] %s157
          %160 = dma.hbm_to_vmem [thread:$0]  %s156, 128, %s158, %s146
        $region24: #{tpu_custom_call.1} parent=19 // pred_fallthru
          _
      $region20: #{tpu_custom_call.1} parent=5 // pred_fallthru
        _
      %p161 = scmp.le.s32.totalorder 1, %s15
      %p162 = scmp.lt.s32.totalorder %s15, 3
      %p163 = pnand %p161, %p162
      %p164 = pneg %p163
      // Predicated region
      $region25: #{tpu_custom_call.1} parent=5 // pred_check
        _
      $region26: #{tpu_custom_call.1} parent=5 // pred_check_branch
        %166 = sbr.rel (%p163) target = $region28
      $region27: #{tpu_custom_call.1} parent=5 // pred_region
        %s167 = ssub.s32 %s15, 1
        %s168 = sand.u32 %s40, 1
        %s169 = scalar_lea.sflag [#allocation3], %s168
        %s170 = sand.u32 %s40, 1
        %s171 = smul.addr %s170, 8
        %s172 = scalar_lea.vmem [#allocation2], %s171
        // Predicated region
        $region29: #{tpu_custom_call.1} parent=27 // pred_check
          %p173 = pneg %p53
        $region30: #{tpu_custom_call.1} parent=27 // pred_check_branch
          %175 = sbr.rel (%p173) target = $region32
        $region31: #{tpu_custom_call.1} parent=27 // pred_region
          %177 = dma.done %s169, 128
        $region32: #{tpu_custom_call.1} parent=27 // pred_fallthru
          _
        // Predicated region
        $region33: #{tpu_custom_call.1} parent=27 // pred_check
          %p178 = pneg %p79
        $region34: #{tpu_custom_call.1} parent=27 // pred_check_branch
          %180 = sbr.rel (%p178) target = $region36
        $region35: #{tpu_custom_call.1} parent=27 // pred_region
          %182 = dma.done [#allocation6], 1024
        $region36: #{tpu_custom_call.1} parent=27 // pred_fallthru
          _
        %s183 = sand.u32 %s40, 1
        %s184 = scalar_lea.sflag [#allocation3], %s183
        %s185 = sand.u32 %s40, 1
        %s186 = smul.addr %s185, 8
        %s187 = scalar_lea.vmem [#allocation2], %s186
        %p188 = pneg %p53
        %p189 = pneg %p50
        %p190 = pneg %p79
        %p191 = pneg %p76
        %p192 = pneg %p107
        %p193 = pneg %p104
        %s194 = sand.u32 %s94, 1
        %s195 = scalar_lea.sflag [#allocation4], %s194
        %s196 = sand.u32 %s94, 1
        %s197 = smul.addr %s196, 8
        %s198 = scalar_lea.vmem [#allocation7], %s197
        %v199 = vld [vmem:[%s172] sm:$0xff]
        %v200 = vpack.c.bf16 %v199, %v199
        %v201 = vld [vmem:[#allocation5] sm:$0xf]
        %v202 = vld [vmem:[#allocation5 + $0x4] sm:$0xf]
        %v203 = vld [vmem:[#allocation5 + $0x8] sm:$0xf]
        %v204 = vld [vmem:[#allocation5 + $0xc] sm:$0xf]
        %v205 = vld [vmem:[#allocation5 + $0x10] sm:$0xf]
        %v206 = vld [vmem:[#allocation5 + $0x14] sm:$0xf]
        %v207 = vld [vmem:[#allocation5 + $0x18] sm:$0xf]
        %v208 = vld [vmem:[#allocation5 + $0x1c] sm:$0xf]
        %v209 = vld [vmem:[#allocation5 + $0x20] sm:$0xf]
        %v210 = vld [vmem:[#allocation5 + $0x24] sm:$0xf]
        %v211 = vld [vmem:[#allocation5 + $0x28] sm:$0xf]
        %v212 = vld [vmem:[#allocation5 + $0x2c] sm:$0xf]
        %v213 = vld [vmem:[#allocation5 + $0x30] sm:$0xf]
        %v214 = vld [vmem:[#allocation5 + $0x34] sm:$0xf]
        %v215 = vld [vmem:[#allocation5 + $0x38] sm:$0xf]
        %v216 = vld [vmem:[#allocation5 + $0x3c] sm:$0xf]
        %v233 = vunpack.c.l.b16 %v201
        %v234 = vunpack.c.l.b16 %v202
        %v235 = vunpack.c.l.b16 %v203
        %v236 = vunpack.c.l.b16 %v204
        %v237 = vunpack.c.l.b16 %v205
        %v238 = vunpack.c.l.b16 %v206
        %v239 = vunpack.c.l.b16 %v207
        %v240 = vunpack.c.l.b16 %v208
        %v241 = vunpack.c.l.b16 %v209
        %v242 = vunpack.c.l.b16 %v210
        %v243 = vunpack.c.l.b16 %v211
        %v244 = vunpack.c.l.b16 %v212
        %v245 = vunpack.c.l.b16 %v213
        %v246 = vunpack.c.l.b16 %v214
        %v247 = vunpack.c.l.b16 %v215
        %v248 = vunpack.c.l.b16 %v216
        %v249 = vpack.c.b16 %v234, %v233
        %v250 = vpack.c.b16 %v236, %v235
        %v251 = vpack.c.b16 %v238, %v237
        %v252 = vpack.c.b16 %v240, %v239
        %v253 = vpack.c.b16 %v242, %v241
        %v254 = vpack.c.b16 %v244, %v243
        %v255 = vpack.c.b16 %v246, %v245
        %v256 = vpack.c.b16 %v248, %v247
        %265 = vmatpush.bf16.msra.mxu0 %v256
        %266 = vmatpush.bf16.msra.mxu0 %v255
        %267 = vmatpush.bf16.msra.mxu0 %v254
        %268 = vmatpush.bf16.msra.mxu0 %v253
        %269 = vmatpush.bf16.msra.mxu0 %v252
        %270 = vmatpush.bf16.msra.mxu0 %v251
        %271 = vmatpush.bf16.msra.mxu0 %v250
        %272 = vmatpush.bf16.msra.mxu0 %v249
        %273 = vmatmul.bf16.gmra.mxu0 %v200
        %v274 = vpop.f32.mrf.mxu0
        %v275 = vadd.f32 0.0, %v274
        %v276 = vpop.f32.mrf.mxu0
        %277 = vdwg.mxu0
        %278 = vst [vmem:[%s198] sm:$0xff] %v275
        %s279 = sand.u32 %s94, 1
        %s280 = scalar_lea.sflag [#allocation4], %s279
        %s281 = sand.u32 %s94, 1
        %s282 = smul.addr %s281, 8
        %s283 = scalar_lea.vmem [#allocation7], %s282
        // Predicated region
        $region37: #{tpu_custom_call.1} parent=27 // pred_check
          %p284 = pneg %p104
        $region38: #{tpu_custom_call.1} parent=27 // pred_check_branch
          %286 = sbr.rel (%p284) target = $region40
        $region39: #{tpu_custom_call.1} parent=27 // pred_region
          %288 = vsyncadd %s280, 0
          %s289 = sadd.s32 %s25, %s24
          %s290 = smul.addr %s289, 8
          %s291 = scalar_lea.hbm %s2, %s290
          %s293 = sshll.u32 %s283, 4
          %s294 = int_to_ptr.vmem [resolvable:$true] %s293
          %s295 = sshll.u32 %s291, 4
          %s296 = int_to_ptr.hbm [resolvable:$true] %s295
          %298 = dma.vmem_to_hbm [thread:$0]  %s294, 128, %s296, %s280
        $region40: #{tpu_custom_call.1} parent=27 // pred_fallthru
          _
      $region28: #{tpu_custom_call.1} parent=5 // pred_fallthru
        _
      %p299 = scmp.le.s32.totalorder 2, %s15
      // Predicated region
      $region41: #{tpu_custom_call.1} parent=5 // pred_check
        %p300 = pneg %p299
      $region42: #{tpu_custom_call.1} parent=5 // pred_check_branch
        %302 = sbr.rel (%p300) target = $region44
      $region43: #{tpu_custom_call.1} parent=5 // pred_region
        %s303 = ssub.s32 %s15, 2
        // Predicated region
        $region45: #{tpu_custom_call.1} parent=43 // pred_check
          %p304 = pneg %p110
        $region46: #{tpu_custom_call.1} parent=43 // pred_check_branch
          %306 = sbr.rel (%p304) target = $region48
        $region47: #{tpu_custom_call.1} parent=43 // pred_region
          %s307 = sand.u32 %s95, 1
          %s308 = scalar_lea.sflag [#allocation4], %s307
          %s309 = sand.u32 %s95, 1
          %s310 = smul.addr %s309, 8
          %s311 = scalar_lea.vmem [#allocation7], %s310
          %313 = dma.done %s308, 128
        $region48: #{tpu_custom_call.1} parent=43 // pred_fallthru
          _
      $region44: #{tpu_custom_call.1} parent=5 // pred_fallthru
        _
    $region6: #{tpu_custom_call.1} parent=1 // loop_footer
      %s19 = sadd.s32 1, %s15
    $region7: #{tpu_custom_call.1} parent=1 // loop_footer_branch
      %14 = sbr.rel target = $region3
    $region8: #{tpu_custom_call.1} parent=1 // loop_exit
      _
    %314 = vsyncpa [#allocation3], 1
    %s315 = scalar_lea.sflag [#allocation3], 1
    %316 = vsyncpa %s315, 1
    %317 = vsyncpa [#allocation6], 1
    %318 = vsyncpa [#allocation4], 1
    %s319 = scalar_lea.sflag [#allocation4], 1
    %320 = vsyncpa %s319, 1

</llo_original>
